<compile_context>
chip_gen: v6e
topology: v6e:2x2x1
jax: 0.10.0
libtpu: 0.0.40
codegen_flags: <defaults>
</compile_context>

<pallas_src>
import jax
import jax.numpy as jnp
from jax.experimental import pallas as pl
from jax.experimental.pallas import tpu as pltpu


def _round_up(x, m):
    return ((x + m - 1) // m) * m


def _action_value_kernel(s_ref, a_ref, w1s_ref, w1a_ref, b1_ref,
                         w2_ref, b2_ref, w5_ref, b5_ref, out_ref):
    # fc1 + ReLU, with the torch.cat fused into two partial matmuls.
    s = s_ref[...].astype(w1s_ref.dtype)      # [tb, obs] (cast is a no-op in f32)
    a = a_ref[...].astype(w1a_ref.dtype)      # [tb, act]
    h1 = (jnp.dot(s, w1s_ref[...], preferred_element_type=jnp.float32) +
          jnp.dot(a, w1a_ref[...], preferred_element_type=jnp.float32))
    h1 = jnp.maximum(h1 + b1_ref[...], 0.0)                       # [tb, W] f32

    # fc2 + (Identity bn2) + ReLU.
    h2 = jnp.dot(h1.astype(w2_ref.dtype), w2_ref[...],
                 preferred_element_type=jnp.float32)
    h2 = jnp.maximum(h2 + b2_ref[...], 0.0)                       # [tb, W//2] f32

    # fc5 (output width 1): VPU multiply + XLU lane reduce.
    y = jnp.sum(h2 * w5_ref[...], axis=-1) + b5_ref[0, 0]         # [tb]

    # Lane-dense store: write the whole tile as one (1, 1, tb) row.
    out_ref[...] = y.reshape(1, 1, y.shape[0])


def _vmem_bytes(tb, obs, act, net_w, hid, w_bytes):
    """Conservative VMEM-footprint model for one grid step."""
    lane = lambda n: _round_up(max(n, 1), 128)
    sub = lambda n: _round_up(max(n, 1), 8)
    f32 = 4
    # Streamed blocks (double-buffered); narrow feature dims pad to 128 lanes.
    stream = 2 * sub(tb) * (lane(obs) + lane(act)) * f32          # s, a tiles
    stream += 2 * 8 * lane(tb) * f32                              # (1,1,tb) out row
    # VMEM-resident weights/biases (counted double-buffered, conservatively).
    wts = 2 * (sub(obs) * lane(net_w) * w_bytes
               + sub(act) * lane(net_w) * w_bytes
               + 8 * lane(net_w) * f32                            # b1
               + sub(net_w) * lane(hid) * w_bytes                 # w2
               + 2 * 8 * lane(hid) * f32)                         # b2, w5 row
    # Materialized intermediates (fc1 partials, h2, product) + Mosaic scratch.
    inter = sub(tb) * (2 * lane(net_w) + 2 * lane(hid)) * f32
    return stream + wts + inter + 2 * 1024 * 1024


def action_value_forward(s, a, params, *, tile_b=8192, use_bf16=False):
    """ActionValue forward. s: [B, obs], a: [B, act] -> [B, 1] (float32)."""
    w1s, w1a, b1, w2, b2, w5, b5 = params
    s = s.astype(jnp.float32)
    a = a.astype(jnp.float32)
    if use_bf16:
        # Cast MXU weights once here (NOT on the VPU every grid step).
        w1s = w1s.astype(jnp.bfloat16)
        w1a = w1a.astype(jnp.bfloat16)
        w2 = w2.astype(jnp.bfloat16)

    B, obs = s.shape
    act = a.shape[1]
    net_w = w1s.shape[1]
    hid = w2.shape[1]

    # Generation-aware VMEM budget: 64 MiB physical on v7x, 128 MiB on v5e/v6e.
    try:
        cap = int(pltpu.get_tpu_info().vmem_capacity_bytes)
    except Exception:
        cap = 64 * 1024 * 1024
    budget = int(cap * 0.65)
    vmem_limit = min(cap, budget + 16 * 1024 * 1024)

    # Pad the batch only to a sublane multiple (<= 7 rows), never to a tile
    # multiple: the ragged last block is handled by Pallas masking.
    B8 = _round_up(B, 8)
    if B8 != B:
        s = jnp.pad(s, ((0, B8 - B), (0, 0)))
        a = jnp.pad(a, ((0, B8 - B), (0, 0)))

    w_bytes = 2 if use_bf16 else 4
    # Large batch tile to amortize per-grid-step overhead ...
    tb = min(_round_up(tile_b, 8), B8)
    # ... but keep >= 2 grid steps so both v7x TensorCores get work.
    tb = min(tb, max(8, _round_up(pl.cdiv(B8, 2), 8)))
    # ... and shrink until the (conservative) VMEM estimate fits the budget.
    while tb > 8 and _vmem_bytes(tb, obs, act, net_w, hid, w_bytes) > budget:
        tb = max(8, _round_up(tb // 2, 8))

    num_tiles = pl.cdiv(B8, tb)
    grid = (num_tiles,)

    # Resident (constant-index) blocks for the small weights/biases.
    # NOTE: left at the default buffering; pl.Buffered(1) could reclaim a bit of
    # VMEM headroom on v7x but is not required for correctness.
    resident = lambda shape: pl.BlockSpec(shape, lambda i: (0,) * len(shape))

    out = pl.pallas_call(
        _action_value_kernel,
        out_shape=jax.ShapeDtypeStruct((num_tiles, 1, tb), jnp.float32),
        grid=grid,
        in_specs=[
            pl.BlockSpec((tb, obs), lambda i: (i, 0)),          # s tile (streamed)
            pl.BlockSpec((tb, act), lambda i: (i, 0)),          # a tile (streamed)
            resident((obs, net_w)),                             # w1[:obs]
            resident((act, net_w)),                             # w1[obs:]
            resident((1, net_w)),                               # b1
            resident((net_w, hid)),                             # w2
            resident((1, hid)),                                 # b2
            resident((1, hid)),                                 # w5 as a row
            pl.BlockSpec(memory_space=pltpu.MemorySpace.SMEM),  # b5 scalar
        ],
        out_specs=pl.BlockSpec((1, 1, tb), lambda i: (i, 0, 0)),  # lane-dense
        compiler_params=pltpu.CompilerParams(
            dimension_semantics=("parallel",),
            vmem_limit_bytes=vmem_limit,
        ),
    )(s, a, w1s, w1a, b1, w2, b2, w5, b5)

    # (num_tiles, 1, tb) lane-dense slab -> (B, 1); tiny contiguous reshape.
    return out.reshape(num_tiles * tb)[:B].reshape(B, 1)


def init_params(key, obs_count, action_count, net_width):
    """PyTorch-style Linear init: U(-1/sqrt(fan_in), 1/sqrt(fan_in)).

    w1 is split into (w1s, w1a) so the kernel can fuse the concat; w5 is stored
    as a row (1, net_width//2); everything else is [in, out]."""
    def linear(k, fan_in, fan_out):
        kw, kb = jax.random.split(k)
        bound = 1.0 / jnp.sqrt(fan_in)
        w = jax.random.uniform(kw, (fan_in, fan_out), jnp.float32, -bound, bound)
        b = jax.random.uniform(kb, (1, fan_out), jnp.float32, -bound, bound)
        return w, b

    k1, k2, k5 = jax.random.split(key, 3)
    w1, b1 = linear(k1, obs_count + action_count, net_width)
    w2, b2 = linear(k2, net_width, net_width // 2)
    w5, b5 = linear(k5, net_width // 2, 1)

    w1s, w1a = w1[:obs_count], w1[obs_count:]
    w5_row = w5.T                                # (1, net_width//2)
    # fc3 / fc4 / bn1 / bn3 / bn4 exist in __init__ but are unused in forward.
    return (w1s, w1a, b1, w2, b2, w5_row, b5)


def reference_forward(s, a, params):
    w1s, w1a, b1, w2, b2, w5, b5 = params
    w1 = jnp.concatenate([w1s, w1a], axis=0)
    x = jnp.concatenate([s, a], axis=1)
    x = jnp.maximum(x @ w1 + b1, 0.0)
    x = jnp.maximum(x @ w2 + b2, 0.0)
    return x @ w5.T + b5


if __name__ == "__main__":
    batch, obs_count, action_count, net_width = 8, 16, 8, 32

    key = jax.random.PRNGKey(0)
    ks, ka, kp = jax.random.split(key, 3)
    s = jax.random.normal(ks, (batch, obs_count), jnp.float32)
    a = jax.random.normal(ka, (batch, action_count), jnp.float32)
    params = init_params(kp, obs_count, action_count, net_width)

    out = action_value_forward(s, a, params)
    out = jax.block_until_ready(out)

    ref = reference_forward(s, a, params)
    assert out.shape == (batch, 1)
    assert jnp.allclose(out, ref, atol=1e-5, rtol=1e-5)

    print("KERNEL_OK")
</pallas_src>

<mosaic_0001>
module attributes {stable_mosaic.version = 11 : i64} {
  func.func @_action_value_kernel(%arg0: i32, %arg1: memref<8x16xf32, #tpu.memory_space<vmem>>, %arg2: memref<8x8xf32, #tpu.memory_space<vmem>>, %arg3: memref<16x32xf32, #tpu.memory_space<vmem>>, %arg4: memref<8x32xf32, #tpu.memory_space<vmem>>, %arg5: memref<1x32xf32, #tpu.memory_space<vmem>>, %arg6: memref<32x16xf32, #tpu.memory_space<vmem>>, %arg7: memref<1x16xf32, #tpu.memory_space<vmem>>, %arg8: memref<1x16xf32, #tpu.memory_space<vmem>>, %arg9: memref<1x1xf32, #tpu.memory_space<smem>>, %arg10: memref<1x1x8xf32, #tpu.memory_space<vmem>>) attributes {dimension_semantics = [#tpu.dimension_semantics<parallel>], iteration_bounds = array<i64: 1>, scalar_prefetch = 0 : i64, scratch_operands = 0 : i64, tpu.core_type = #tpu.core_type<tc>, window_params = [{transform_indices = @transform_0, window_bounds = array<i64: 8, 16>}, {transform_indices = @transform_1, window_bounds = array<i64: 8, 8>}, {pipeline_mode = #tpu.pipeline_mode<synchronous>, transform_indices = @transform_2, window_bounds = array<i64: 16, 32>}, {pipeline_mode = #tpu.pipeline_mode<synchronous>, transform_indices = @transform_3, window_bounds = array<i64: 8, 32>}, {pipeline_mode = #tpu.pipeline_mode<synchronous>, transform_indices = @transform_4, window_bounds = array<i64: 1, 32>}, {pipeline_mode = #tpu.pipeline_mode<synchronous>, transform_indices = @transform_5, window_bounds = array<i64: 32, 16>}, {pipeline_mode = #tpu.pipeline_mode<synchronous>, transform_indices = @transform_6, window_bounds = array<i64: 1, 16>}, {pipeline_mode = #tpu.pipeline_mode<synchronous>, transform_indices = @transform_7, window_bounds = array<i64: 1, 16>}, {transform_indices = @transform_8, window_bounds = array<i64: 1, 1>}, {transform_indices = @transform_9, window_bounds = array<i64: 1, 1, 8>}]} {
    %c0 = arith.constant 0 : index
    %c0_0 = arith.constant 0 : index
    %0 = vector.load %arg1[%c0, %c0_0] : memref<8x16xf32, #tpu.memory_space<vmem>>, vector<8x16xf32>
    %c0_1 = arith.constant 0 : index
    %c0_2 = arith.constant 0 : index
    %1 = vector.load %arg2[%c0_1, %c0_2] : memref<8x8xf32, #tpu.memory_space<vmem>>, vector<8x8xf32>
    %c0_3 = arith.constant 0 : index
    %c0_4 = arith.constant 0 : index
    %2 = vector.load %arg3[%c0_3, %c0_4] : memref<16x32xf32, #tpu.memory_space<vmem>>, vector<16x32xf32>
    %cst = arith.constant dense<0.000000e+00> : vector<8x32xf32>
    %3 = tpu.matmul %0, %2, %cst {dimension_numbers = #tpu.dot_dimension_numbers<[1], [0], [0], [1], [0, 0, 1, 1], [], []>} : vector<8x16xf32>, vector<16x32xf32>, vector<8x32xf32> -> vector<8x32xf32>
    %c0_5 = arith.constant 0 : index
    %c0_6 = arith.constant 0 : index
    %4 = vector.load %arg4[%c0_5, %c0_6] : memref<8x32xf32, #tpu.memory_space<vmem>>, vector<8x32xf32>
    %cst_7 = arith.constant dense<0.000000e+00> : vector<8x32xf32>
    %5 = tpu.matmul %1, %4, %cst_7 {dimension_numbers = #tpu.dot_dimension_numbers<[1], [0], [0], [1], [0, 0, 1, 1], [], []>} : vector<8x8xf32>, vector<8x32xf32>, vector<8x32xf32> -> vector<8x32xf32>
    %6 = arith.addf %3, %5 : vector<8x32xf32>
    %c0_8 = arith.constant 0 : index
    %c0_9 = arith.constant 0 : index
    %7 = vector.load %arg5[%c0_8, %c0_9] : memref<1x32xf32, #tpu.memory_space<vmem>>, vector<1x32xf32>
    %8 = vector.broadcast %7 : vector<1x32xf32> to vector<8x32xf32>
    %9 = arith.addf %6, %8 : vector<8x32xf32>
    %cst_10 = arith.constant 0.000000e+00 : f32
    %10 = vector.broadcast %cst_10 : f32 to vector<8x32xf32>
    %11 = arith.maximumf %9, %10 : vector<8x32xf32>
    %c0_11 = arith.constant 0 : index
    %c0_12 = arith.constant 0 : index
    %12 = vector.load %arg6[%c0_11, %c0_12] : memref<32x16xf32, #tpu.memory_space<vmem>>, vector<32x16xf32>
    %cst_13 = arith.constant dense<0.000000e+00> : vector<8x16xf32>
    %13 = tpu.matmul %11, %12, %cst_13 {dimension_numbers = #tpu.dot_dimension_numbers<[1], [0], [0], [1], [0, 0, 1, 1], [], []>} : vector<8x32xf32>, vector<32x16xf32>, vector<8x16xf32> -> vector<8x16xf32>
    %c0_14 = arith.constant 0 : index
    %c0_15 = arith.constant 0 : index
    %14 = vector.load %arg7[%c0_14, %c0_15] : memref<1x16xf32, #tpu.memory_space<vmem>>, vector<1x16xf32>
    %15 = vector.broadcast %14 : vector<1x16xf32> to vector<8x16xf32>
    %16 = arith.addf %13, %15 : vector<8x16xf32>
    %cst_16 = arith.constant 0.000000e+00 : f32
    %17 = vector.broadcast %cst_16 : f32 to vector<8x16xf32>
    %18 = arith.maximumf %16, %17 : vector<8x16xf32>
    %c0_17 = arith.constant 0 : index
    %c0_18 = arith.constant 0 : index
    %19 = vector.load %arg8[%c0_17, %c0_18] : memref<1x16xf32, #tpu.memory_space<vmem>>, vector<1x16xf32>
    %20 = vector.broadcast %19 : vector<1x16xf32> to vector<8x16xf32>
    %21 = arith.mulf %18, %20 : vector<8x16xf32>
    %cst_19 = arith.constant dense<0.000000e+00> : vector<8xf32>
    %22 = vector.multi_reduction <add>, %21, %cst_19 [1] : vector<8x16xf32> to vector<8xf32>
    %c0_20 = arith.constant 0 : index
    %c0_21 = arith.constant 0 : index
    %23 = memref.load %arg9[%c0_20, %c0_21] : memref<1x1xf32, #tpu.memory_space<smem>>
    %24 = vector.broadcast %23 : f32 to vector<8xf32>
    %25 = arith.addf %22, %24 : vector<8xf32>
    %26 = vector.shape_cast %25 : vector<8xf32> to vector<1x1x8xf32>
    %c0_22 = arith.constant 0 : index
    %c0_23 = arith.constant 0 : index
    %c0_24 = arith.constant 0 : index
    %27 = vector.load %arg10[%c0_22, %c0_23, %c0_24] : memref<1x1x8xf32, #tpu.memory_space<vmem>>, vector<1x1x8xf32>
    tpu.vector_store %arg10[%c0_22, %c0_23, %c0_24], %26 {strides = array<i32>} : memref<1x1x8xf32, #tpu.memory_space<vmem>>, vector<1x1x8xf32>,
    return
  }
  func.func @transform_0(%arg0: i32) -> (i32, i32) {
    %c0_i32 = arith.constant 0 : i32
    %c0_i32_0 = arith.constant 0 : i32
    return %arg0, %c0_i32 : i32, i32
  }
  func.func @transform_1(%arg0: i32) -> (i32, i32) {
    %c0_i32 = arith.constant 0 : i32
    %c0_i32_0 = arith.constant 0 : i32
    return %arg0, %c0_i32 : i32, i32
  }
  func.func @transform_2(%arg0: i32) -> (i32, i32) {
    %c0_i32 = arith.constant 0 : i32
    %c0_i32_0 = arith.constant 0 : i32
    %c0_i32_1 = arith.constant 0 : i32
    return %c0_i32, %c0_i32_0 : i32, i32
  }
  func.func @transform_3(%arg0: i32) -> (i32, i32) {
    %c0_i32 = arith.constant 0 : i32
    %c0_i32_0 = arith.constant 0 : i32
    %c0_i32_1 = arith.constant 0 : i32
    return %c0_i32, %c0_i32_0 : i32, i32
  }
  func.func @transform_4(%arg0: i32) -> (i32, i32) {
    %c0_i32 = arith.constant 0 : i32
    %c0_i32_0 = arith.constant 0 : i32
    %c0_i32_1 = arith.constant 0 : i32
    return %c0_i32, %c0_i32_0 : i32, i32
  }
  func.func @transform_5(%arg0: i32) -> (i32, i32) {
    %c0_i32 = arith.constant 0 : i32
    %c0_i32_0 = arith.constant 0 : i32
    %c0_i32_1 = arith.constant 0 : i32
    return %c0_i32, %c0_i32_0 : i32, i32
  }
  func.func @transform_6(%arg0: i32) -> (i32, i32) {
    %c0_i32 = arith.constant 0 : i32
    %c0_i32_0 = arith.constant 0 : i32
    %c0_i32_1 = arith.constant 0 : i32
    return %c0_i32, %c0_i32_0 : i32, i32
  }
  func.func @transform_7(%arg0: i32) -> (i32, i32) {
    %c0_i32 = arith.constant 0 : i32
    %c0_i32_0 = arith.constant 0 : i32
    %c0_i32_1 = arith.constant 0 : i32
    return %c0_i32, %c0_i32_0 : i32, i32
  }
  func.func @transform_8(%arg0: i32) -> (i32, i32) {
    %c0_i32 = arith.constant 0 : i32
    %c0_i32_0 = arith.constant 0 : i32
    %c0_i32_1 = arith.constant 0 : i32
    return %c0_i32, %c0_i32_0 : i32, i32
  }
  func.func @transform_9(%arg0: i32) -> (i32, i32, i32) {
    %c0_i32 = arith.constant 0 : i32
    %c0_i32_0 = arith.constant 0 : i32
    %c0_i32_1 = arith.constant 0 : i32
    return %arg0, %c0_i32, %c0_i32_0 : i32, i32, i32
  }
}

</mosaic_0001>

<llo_original>
// kernel: tpu_custom_call.1
$region0: #{tpu_custom_call.1}
  #allocation0 [shape = 'u32[]', space=smem, size = 0x4, offset = 0x4, fixed_abs, tag = 'smem constant byte address 0x4 - core index']
  #allocation1 [shape = 'u32[144,128]{1,0:T(1,128)}', space=vmem, size = 0x12000, scoped, tag = 'internal scratch']
  #allocation2 [shape = 'f32[1,1]{1,0:T(1,128)S(6)}', space=smem, size = 0x200, scoped, tag = 'scoped memory for tpu_custom_call.1']
  %s0 = inlined_call_operand.vmem [shape: f32[8,16], index: 0, kind: input, shape index: {}]
  %s1 = inlined_call_operand.vmem [shape: f32[8,8], index: 1, kind: input, shape index: {}]
  %s2 = inlined_call_operand.vmem [shape: f32[16,32], index: 2, kind: input, shape index: {}]
  %s3 = inlined_call_operand.vmem [shape: f32[8,32], index: 3, kind: input, shape index: {}]
  %s4 = inlined_call_operand.vmem [shape: f32[1,32], index: 4, kind: input, shape index: {}]
  %s5 = inlined_call_operand.vmem [shape: f32[32,16], index: 5, kind: input, shape index: {}]
  %s6 = inlined_call_operand.vmem [shape: f32[1,16], index: 6, kind: input, shape index: {}]
  %s7 = inlined_call_operand.vmem [shape: f32[1,16], index: 7, kind: input, shape index: {}]
  %s8 = inlined_call_operand.<no memory space> [shape: f32[1,1], index: 8, kind: input, shape index: {}]
  %s9 = inlined_call_operand.hbm [shape: f32[1,1,8], index: 9, kind: output, shape index: {}]
  %s10 = sld [smem:[#allocation0]]
  $region46: #{tpu_custom_call.1} parent=0
    _
  %s12 = ssub.s32 1, %s10
  %s13 = scalar_select 0, %s12, %s10
  %14 = sst [smem:[#allocation2]] %s8
  $region1: #{tpu_custom_call.1} parent=0
    #allocation3 [shape = 'u8[512]{0}', space=vmem, size = 0x400, scoped, tag = 'output window, operand 0, single buffered']
    #allocation4 [shape = 's32[1]{0}', space=sflag, size = 0x4, scoped, tag = 'scoped memory for tpu_custom_call.1']
    %15 = vsyncpa [#allocation4], 0
    // Predicated region
    $region2: #{tpu_custom_call.1} parent=1 // pred_check
      _
    $region3: #{tpu_custom_call.1} parent=1 // pred_check_branch
      %17 = sbr.rel (0) target = $region5
    $region4: #{tpu_custom_call.1} parent=1 // pred_region
      _
    $region5: #{tpu_custom_call.1} parent=1 // pred_fallthru
      _
    // Predicated region
    $region6: #{tpu_custom_call.1} parent=1 // pred_check
      _
    $region7: #{tpu_custom_call.1} parent=1 // pred_check_branch
      %19 = sbr.rel (0) target = $region9
    $region8: #{tpu_custom_call.1} parent=1 // pred_region
      _
    $region9: #{tpu_custom_call.1} parent=1 // pred_fallthru
      _
    // Predicated region
    $region10: #{tpu_custom_call.1} parent=1 // pred_check
      _
    $region11: #{tpu_custom_call.1} parent=1 // pred_check_branch
      %21 = sbr.rel (0) target = $region13
    $region12: #{tpu_custom_call.1} parent=1 // pred_region
      _
    $region13: #{tpu_custom_call.1} parent=1 // pred_fallthru
      _
    // Predicated region
    $region14: #{tpu_custom_call.1} parent=1 // pred_check
      _
    $region15: #{tpu_custom_call.1} parent=1 // pred_check_branch
      %23 = sbr.rel (0) target = $region17
    $region16: #{tpu_custom_call.1} parent=1 // pred_region
      _
    $region17: #{tpu_custom_call.1} parent=1 // pred_fallthru
      _
    // Predicated region
    $region18: #{tpu_custom_call.1} parent=1 // pred_check
      _
    $region19: #{tpu_custom_call.1} parent=1 // pred_check_branch
      %25 = sbr.rel (0) target = $region21
    $region20: #{tpu_custom_call.1} parent=1 // pred_region
      _
    $region21: #{tpu_custom_call.1} parent=1 // pred_fallthru
      _
    // Predicated region
    $region22: #{tpu_custom_call.1} parent=1 // pred_check
      _
    $region23: #{tpu_custom_call.1} parent=1 // pred_check_branch
      %27 = sbr.rel (0) target = $region25
    $region24: #{tpu_custom_call.1} parent=1 // pred_region
      _
    $region25: #{tpu_custom_call.1} parent=1 // pred_fallthru
      _
    // Predicated region
    $region26: #{tpu_custom_call.1} parent=1 // pred_check
      _
    $region27: #{tpu_custom_call.1} parent=1 // pred_check_branch
      %29 = sbr.rel (0) target = $region29
    $region28: #{tpu_custom_call.1} parent=1 // pred_region
      _
    $region29: #{tpu_custom_call.1} parent=1 // pred_fallthru
      _
    // Predicated region
    $region30: #{tpu_custom_call.1} parent=1 // pred_check
      _
    $region31: #{tpu_custom_call.1} parent=1 // pred_check_branch
      %31 = sbr.rel (0) target = $region33
    $region32: #{tpu_custom_call.1} parent=1 // pred_region
      _
    $region33: #{tpu_custom_call.1} parent=1 // pred_fallthru
      _
    // Predicated region
    $region34: #{tpu_custom_call.1} parent=1 // pred_check
      _
    $region35: #{tpu_custom_call.1} parent=1 // pred_check_branch
      %33 = sbr.rel (0) target = $region37
    $region36: #{tpu_custom_call.1} parent=1 // pred_region
      _
    $region37: #{tpu_custom_call.1} parent=1 // pred_fallthru
      _
    %v34 = vld [vmem:[%s0] sm:$0xff]
    %v35 = vld [vmem:[%s1] sm:$0xff]
    %v36 = vld [vmem:[%s2] sm:$0xff]
    %v37 = vld [vmem:[%s2 + $0x8] sm:$0xff]
    %v38 = vld [vmem:[%s3] sm:$0xff]
    %vm39 = vcmask 64512
    %v41 = vsel %vm39, %v35, 0
    %43 = vmatprep.subr.mxu0 0.0
    %44 = vmatpush1.msra.mxu0 0.0
    %45 = vmatprep.subr.mxu0 0.0
    %46 = vmatpush1.msra.mxu0 0.0
    %47 = vmatprep.subr.mxu0 0.0
    %48 = vmatpush1.msra.mxu0 0.0
    %49 = vmatprep.subr.mxu0 0.0
    %50 = vmatpush1.msra.mxu0 0.0
    %51 = vmatprep.subr.mxu0 0.0
    %52 = vmatpush1.msra.mxu0 0.0
    %53 = vmatprep.subr.mxu0 0.0
    %54 = vmatpush1.msra.mxu0 0.0
    %55 = vmatprep.subr.mxu0 0.0
    %56 = vmatpush1.msra.mxu0 0.0
    %57 = vmatprep.subr.mxu0 0.0
    %58 = vmatpush1.msra.mxu0 0.0
    %59 = vmatprep.subr.mxu0 0.0
    %60 = vmatpush1.msra.mxu0 0.0
    %61 = vmatprep.subr.mxu0 0.0
    %62 = vmatpush1.msra.mxu0 0.0
    %63 = vmatprep.subr.mxu0 0.0
    %64 = vmatpush1.msra.mxu0 0.0
    %65 = vmatprep.subr.mxu0 0.0
    %66 = vmatpush1.msra.mxu0 0.0
    %67 = vmatprep.subr.mxu0 0.0
    %68 = vmatpush1.msra.mxu0 0.0
    %69 = vmatprep.subr.mxu0 0.0
    %70 = vmatpush1.msra.mxu0 0.0
    %71 = vmatprep.subr.mxu0 0.0
    %72 = vmatpush1.msra.mxu0 0.0
    %73 = vmatprep.subr.mxu0 0.0
    %74 = vmatpush1.msra.mxu0 %v38
    %75 = vmatprep.subr.mxu0 0.0
    %76 = vmatpush2.msra.mxu0 0.0
    %77 = vmatprep.subr.mxu0 0.0
    %78 = vmatpush2.msra.mxu0 0.0
    %79 = vmatprep.subr.mxu0 0.0
    %80 = vmatpush2.msra.mxu0 0.0
    %81 = vmatprep.subr.mxu0 0.0
    %82 = vmatpush2.msra.mxu0 0.0
    %83 = vmatprep.subr.mxu0 0.0
    %84 = vmatpush2.msra.mxu0 0.0
    %85 = vmatprep.subr.mxu0 0.0
    %86 = vmatpush2.msra.mxu0 0.0
    %87 = vmatprep.subr.mxu0 0.0
    %88 = vmatpush2.msra.mxu0 0.0
    %89 = vmatprep.subr.mxu0 0.0
    %90 = vmatpush2.msra.mxu0 0.0
    %91 = vmatprep.subr.mxu0 0.0
    %92 = vmatpush2.msra.mxu0 0.0
    %93 = vmatprep.subr.mxu0 0.0
    %94 = vmatpush2.msra.mxu0 0.0
    %95 = vmatprep.subr.mxu0 0.0
    %96 = vmatpush2.msra.mxu0 0.0
    %97 = vmatprep.subr.mxu0 0.0
    %98 = vmatpush2.msra.mxu0 0.0
    %99 = vmatprep.subr.mxu0 0.0
    %100 = vmatpush2.msra.mxu0 0.0
    %101 = vmatprep.subr.mxu0 0.0
    %102 = vmatpush2.msra.mxu0 0.0
    %103 = vmatprep.subr.mxu0 0.0
    %104 = vmatpush2.msra.mxu0 0.0
    %105 = vmatprep.subr.mxu0 0.0
    %106 = vmatpush2.msra.mxu0 0.0
    %107 = vmatprep.mubr.f32.mxu0 0.0
    %108 = vmatmul.mubr.f32.gmra.mxu0 %v41
    %v109 = vpop.f32.mrf.mxu0
    %v110 = vadd.f32 0.0, %v109
    %v111 = vpop.f32.mrf.mxu0
    %112 = vdwg.mxu0
    %vm113 = vcmask 130048
    %v115 = vsel %vm113, %v34, 0
    %117 = vmatprep.subr.mxu0 0.0
    %118 = vmatpush1.msra.mxu0 0.0
    %119 = vmatprep.subr.mxu0 0.0
    %120 = vmatpush1.msra.mxu0 0.0
    %121 = vmatprep.subr.mxu0 0.0
    %122 = vmatpush1.msra.mxu0 0.0
    %123 = vmatprep.subr.mxu0 0.0
    %124 = vmatpush1.msra.mxu0 0.0
    %125 = vmatprep.subr.mxu0 0.0
    %126 = vmatpush1.msra.mxu0 0.0
    %127 = vmatprep.subr.mxu0 0.0
    %128 = vmatpush1.msra.mxu0 0.0
    %129 = vmatprep.subr.mxu0 0.0
    %130 = vmatpush1.msra.mxu0 0.0
    %131 = vmatprep.subr.mxu0 0.0
    %132 = vmatpush1.msra.mxu0 0.0
    %133 = vmatprep.subr.mxu0 0.0
    %134 = vmatpush1.msra.mxu0 0.0
    %135 = vmatprep.subr.mxu0 0.0
    %136 = vmatpush1.msra.mxu0 0.0
    %137 = vmatprep.subr.mxu0 0.0
    %138 = vmatpush1.msra.mxu0 0.0
    %139 = vmatprep.subr.mxu0 0.0
    %140 = vmatpush1.msra.mxu0 0.0
    %141 = vmatprep.subr.mxu0 0.0
    %142 = vmatpush1.msra.mxu0 0.0
    %143 = vmatprep.subr.mxu0 0.0
    %144 = vmatpush1.msra.mxu0 0.0
    %145 = vmatprep.subr.mxu0 0.0
    %146 = vmatpush1.msra.mxu0 %v37
    %147 = vmatprep.subr.mxu0 0.0
    %148 = vmatpush1.msra.mxu0 %v36
    %149 = vmatprep.subr.mxu0 0.0
    %150 = vmatpush2.msra.mxu0 0.0
    %151 = vmatprep.subr.mxu0 0.0
    %152 = vmatpush2.msra.mxu0 0.0
    %153 = vmatprep.subr.mxu0 0.0
    %154 = vmatpush2.msra.mxu0 0.0
    %155 = vmatprep.subr.mxu0 0.0
    %156 = vmatpush2.msra.mxu0 0.0
    %157 = vmatprep.subr.mxu0 0.0
    %158 = vmatpush2.msra.mxu0 0.0
    %159 = vmatprep.subr.mxu0 0.0
    %160 = vmatpush2.msra.mxu0 0.0
    %161 = vmatprep.subr.mxu0 0.0
    %162 = vmatpush2.msra.mxu0 0.0
    %163 = vmatprep.subr.mxu0 0.0
    %164 = vmatpush2.msra.mxu0 0.0
    %165 = vmatprep.subr.mxu0 0.0
    %166 = vmatpush2.msra.mxu0 0.0
    %167 = vmatprep.subr.mxu0 0.0
    %168 = vmatpush2.msra.mxu0 0.0
    %169 = vmatprep.subr.mxu0 0.0
    %170 = vmatpush2.msra.mxu0 0.0
    %171 = vmatprep.subr.mxu0 0.0
    %172 = vmatpush2.msra.mxu0 0.0
    %173 = vmatprep.subr.mxu0 0.0
    %174 = vmatpush2.msra.mxu0 0.0
    %175 = vmatprep.subr.mxu0 0.0
    %176 = vmatpush2.msra.mxu0 0.0
    %177 = vmatprep.subr.mxu0 0.0
    %178 = vmatpush2.msra.mxu0 0.0
    %179 = vmatprep.subr.mxu0 0.0
    %180 = vmatpush2.msra.mxu0 0.0
    %181 = vmatprep.mubr.f32.mxu0 0.0
    %182 = vmatmul.mubr.f32.gmra.mxu0 %v115
    %v183 = vpop.f32.mrf.mxu0
    %v184 = vadd.f32 %v110, %v183
    %v185 = vpop.f32.mrf.mxu0
    %186 = vdwg.mxu0
    %v187 = vld [vmem:[%s4] sm:$0x1]
    %v189 = vlaneseq
    %v190 = vshrl.u32 %v189, 7
    %v191 = vsub.s32 0, %v190
    %v192 = vrot.slane %v187, %v191
    %v194 = vadd.f32 %v184, %v192
    %v195 = vmax.f32 %v194, 0.0
    %v196 = vld [vmem:[%s5] sm:$0xff]
    %v197 = vld [vmem:[%s5 + $0x8] sm:$0xff]
    %v198 = vld [vmem:[%s5 + $0x10] sm:$0xff]
    %v199 = vld [vmem:[%s5 + $0x18] sm:$0xff]
    %v200 = vld [vmem:[%s6] sm:$0x1]
    %v202 = vlaneseq
    %v203 = vshrl.u32 %v202, 7
    %v204 = vsub.s32 0, %v203
    %v205 = vrot.slane %v200, %v204
    %vm207 = vcmask 261120
    %v209 = vsel %vm207, %v195, 0
    %211 = vmatprep.subr.mxu0 0.0
    %212 = vmatpush1.msra.mxu0 0.0
    %213 = vmatprep.subr.mxu0 0.0
    %214 = vmatpush1.msra.mxu0 0.0
    %215 = vmatprep.subr.mxu0 0.0
    %216 = vmatpush1.msra.mxu0 0.0
    %217 = vmatprep.subr.mxu0 0.0
    %218 = vmatpush1.msra.mxu0 0.0
    %219 = vmatprep.subr.mxu0 0.0
    %220 = vmatpush1.msra.mxu0 0.0
    %221 = vmatprep.subr.mxu0 0.0
    %222 = vmatpush1.msra.mxu0 0.0
    %223 = vmatprep.subr.mxu0 0.0
    %224 = vmatpush1.msra.mxu0 0.0
    %225 = vmatprep.subr.mxu0 0.0
    %226 = vmatpush1.msra.mxu0 0.0
    %227 = vmatprep.subr.mxu0 0.0
    %228 = vmatpush1.msra.mxu0 0.0
    %229 = vmatprep.subr.mxu0 0.0
    %230 = vmatpush1.msra.mxu0 0.0
    %231 = vmatprep.subr.mxu0 0.0
    %232 = vmatpush1.msra.mxu0 0.0
    %233 = vmatprep.subr.mxu0 0.0
    %234 = vmatpush1.msra.mxu0 0.0
    %235 = vmatprep.subr.mxu0 0.0
    %236 = vmatpush1.msra.mxu0 %v199
    %237 = vmatprep.subr.mxu0 0.0
    %238 = vmatpush1.msra.mxu0 %v198
    %239 = vmatprep.subr.mxu0 0.0
    %240 = vmatpush1.msra.mxu0 %v197
    %241 = vmatprep.subr.mxu0 0.0
    %242 = vmatpush1.msra.mxu0 %v196
    %243 = vmatprep.subr.mxu0 0.0
    %244 = vmatpush2.msra.mxu0 0.0
    %245 = vmatprep.subr.mxu0 0.0
    %246 = vmatpush2.msra.mxu0 0.0
    %247 = vmatprep.subr.mxu0 0.0
    %248 = vmatpush2.msra.mxu0 0.0
    %249 = vmatprep.subr.mxu0 0.0
    %250 = vmatpush2.msra.mxu0 0.0
    %251 = vmatprep.subr.mxu0 0.0
    %252 = vmatpush2.msra.mxu0 0.0
    %253 = vmatprep.subr.mxu0 0.0
    %254 = vmatpush2.msra.mxu0 0.0
    %255 = vmatprep.subr.mxu0 0.0
    %256 = vmatpush2.msra.mxu0 0.0
    %257 = vmatprep.subr.mxu0 0.0
    %258 = vmatpush2.msra.mxu0 0.0
    %259 = vmatprep.subr.mxu0 0.0
    %260 = vmatpush2.msra.mxu0 0.0
    %261 = vmatprep.subr.mxu0 0.0
    %262 = vmatpush2.msra.mxu0 0.0
    %263 = vmatprep.subr.mxu0 0.0
    %264 = vmatpush2.msra.mxu0 0.0
    %265 = vmatprep.subr.mxu0 0.0
    %266 = vmatpush2.msra.mxu0 0.0
    %267 = vmatprep.subr.mxu0 0.0
    %268 = vmatpush2.msra.mxu0 0.0
    %269 = vmatprep.subr.mxu0 0.0
    %270 = vmatpush2.msra.mxu0 0.0
    %271 = vmatprep.subr.mxu0 0.0
    %272 = vmatpush2.msra.mxu0 0.0
    %273 = vmatprep.subr.mxu0 0.0
    %274 = vmatpush2.msra.mxu0 0.0
    %275 = vmatprep.mubr.f32.mxu0 0.0
    %276 = vmatmul.mubr.f32.gmra.mxu0 %v209
    %v277 = vpop.f32.mrf.mxu0
    %v278 = vadd.f32 %v205, %v277
    %v279 = vpop.f32.mrf.mxu0
    %280 = vdwg.mxu0
    %v281 = vmax.f32 %v278, 0.0
    %v282 = vld [vmem:[%s7] sm:$0x1]
    %v284 = vlaneseq
    %v285 = vshrl.u32 %v284, 7
    %v286 = vsub.s32 0, %v285
    %v287 = vrot.slane %v282, %v286
    %v289 = vmul.f32 %v281, %v287
    %v290 = vsel %vm113, %v289, 0.0
    %291 = vadd.xlane.f32.xlu0 %v290
    %v292 = vpop.xlane.xlu0 %291
    %s293 = sld [smem:[#allocation2]]
    %v294 = vstv %s293
    %v295 = vadd.f32 %v292, %v294
    %v297 = vlaneseq
    %v298 = vand.u32 %v297, 127
    %v299 = vlaneseq
    %v300 = vshrl.u32 %v299, 7
    %v301 = vsub.s32 %v298, %v300
    %v302 = vrot.slane %v295, %v301
    %vm304 = vcmask 57344
    %305 = vst.msk [vmem:[#allocation3] sm:$0x1] %vm304, %v302
    // Predicated region
    $region38: #{tpu_custom_call.1} parent=1 // pred_check
      _
    $region39: #{tpu_custom_call.1} parent=1 // pred_check_branch
      %307 = sbr.rel (0) target = $region41
    $region40: #{tpu_custom_call.1} parent=1 // pred_region
      %s309 = ssub.s32 16, 16
      %310 = vsyncadd [#allocation4], %s309
      %s312 = sshll.u32 [#allocation3], 4
      %s313 = int_to_ptr.vmem [resolvable:$true] %s312
      %315 = dma.vmem_to_hbm [thread:$0]  %s313, 16, %s9, [#allocation4]
    $region41: #{tpu_custom_call.1} parent=1 // pred_fallthru
      _
    // Predicated region
    $region42: #{tpu_custom_call.1} parent=1 // pred_check
      _
    $region43: #{tpu_custom_call.1} parent=1 // pred_check_branch
      %317 = sbr.rel (0) target = $region45
    $region44: #{tpu_custom_call.1} parent=1 // pred_region
      %318 = dma.done [#allocation4], 16
    $region45: #{tpu_custom_call.1} parent=1 // pred_fallthru
      _
    %319 = vsyncpa [#allocation4], 1

</llo_original>
